<compile_context>
chip_gen: v7x
topology: tpu7x:2x2x1
jax: 0.10.0
libtpu: 0.0.40
codegen_flags: <defaults>
</compile_context>

<pallas_src>
import jax
import jax.numpy as jnp
from jax.experimental import pallas as pl
from jax.experimental.pallas import tpu as pltpu

_SUBLANE = 8
_LANE = 128


def _round_up(x, m):
    return ((x + m - 1) // m) * m


def _conv3x3_mxu_kernel(w_ref, b_ref, t_ref, o_ref):
    # w_ref: (Cout_pad, 9*Cin)   reordered + zero-padded conv weights
    # b_ref: (Cout_pad, 1)       zero-padded bias
    # t_ref: (9*Cin, N*L_pad)    im2col taps, batch folded into lanes
    # o_ref: (Cout_pad, N*L_pad) lane-dense (128-multiple) wide output
    o_ref[...] = (
        jnp.dot(w_ref[...], t_ref[...], preferred_element_type=jnp.float32)
        + b_ref[...]
    ).astype(o_ref.dtype)


def prepare_params(w_oihw, b):
    """One-time parameter plumbing (hoisted out of the per-call path)."""
    Cout, Cin, KH, KW = w_oihw.shape
    assert (KH, KW) == (3, 3)
    Cout_pad = _round_up(Cout, _SUBLANE)
    # w2[o, (kh*3+kw)*Cin + c] == W[o, c, kh, kw]  (matches tap-row order).
    w2 = jnp.transpose(w_oihw, (0, 2, 3, 1)).reshape(Cout, 9 * Cin)
    w2 = jnp.pad(w2, ((0, Cout_pad - Cout), (0, 0))).astype(jnp.float32)
    b2 = jnp.pad(b.reshape(Cout, 1),
                 ((0, Cout_pad - Cout), (0, 0))).astype(jnp.float32)
    return w2, b2


def out_branch_forward(x_nchw, w2, b2):
    """Conv2d(nc_in, 4, 3, padding=1) forward, NCHW in / NCHW out."""
    N, Cin, H, W = x_nchw.shape
    Cout_pad, K = w2.shape
    assert K == 9 * Cin
    Cout = 4                      # Out_Branch always has 4 output channels

    Wp = W + 2                    # padded width == stride of flattened rows
    L_out = H * Wp                # "wide" output length (2 junk cols per row)
    L_pad = _round_up(L_out, _LANE)   # lane-dense, 128-multiple output stride
    max_off = 2 * Wp + 2          # largest 3x3 tap offset in the flat plane
    L_need = max_off + L_pad      # flat source length every tap slice needs

    # ---- layout plumbing in plain XLA (single pad + static slices) ----
    # One pad supplies the 1-pixel conv halo AND the extra zero rows below so
    # every tap window of width L_pad stays in bounds.
    extra_rows = -(-max(L_need - (H + 2) * Wp, 0) // Wp)     # ceil-div
    x_pad = jnp.pad(x_nchw, ((0, 0), (0, 0), (1, 1 + extra_rows), (1, 1)))
    Hp_ext = H + 2 + extra_rows
    assert Hp_ext * Wp >= L_need, "tap slices would read out of bounds"
    x_flat = x_pad.reshape(N, Cin, Hp_ext * Wp)

    # im2col: 9 tap-shifted views, batch folded into the lane axis.
    #   taps[(kh*3+kw)*Cin + c, n*L_pad + l] = x_pad_flat[n, c, l + kh*Wp + kw]
    taps = jnp.stack(
        [x_flat[:, :, kh * Wp + kw: kh * Wp + kw + L_pad]
         for kh in range(3) for kw in range(3)],
        axis=0,
    )                                                   # (9, N, Cin, L_pad)
    taps = jnp.transpose(taps, (0, 2, 1, 3)).reshape(9 * Cin, N * L_pad)

    o_wide = pl.pallas_call(
        _conv3x3_mxu_kernel,
        out_shape=jax.ShapeDtypeStruct((Cout_pad, N * L_pad), x_nchw.dtype),
        grid=(1,),    # whole problem (~250 KB) fits VMEM on every generation
        in_specs=[
            pl.BlockSpec((Cout_pad, 9 * Cin), lambda i: (0, 0)),
            pl.BlockSpec((Cout_pad, 1), lambda i: (0, 0)),
            pl.BlockSpec((9 * Cin, N * L_pad), lambda i: (0, 0)),
        ],
        out_specs=pl.BlockSpec((Cout_pad, N * L_pad), lambda i: (0, 0)),
        compiler_params=pltpu.CompilerParams(
            dimension_semantics=("arbitrary",)),
    )(w2, b2, taps)

    # Crop padded Cout rows, padded lanes and junk columns; recover NCHW.
    out = o_wide[:Cout].reshape(Cout, N, L_pad)[:, :, :L_out]
    out = out.reshape(Cout, N, H, Wp)[:, :, :, :W]
    return jnp.transpose(out, (1, 0, 2, 3))


if __name__ == "__main__":
    # Small shapes consistent with Out_Branch(nc_in=4): x -> (2, 4, 16, 16)
    N, Cin, H, W = 2, 4, 16, 16
    Cout = 4

    key = jax.random.PRNGKey(0)
    kx, kw, kb = jax.random.split(key, 3)
    x = jax.random.normal(kx, (N, Cin, H, W), dtype=jnp.float32)
    # Deterministic synthetic parameters (Conv2d weight OIHW, bias (Cout,))
    w = jax.random.normal(kw, (Cout, Cin, 3, 3), dtype=jnp.float32) * 0.1
    b = jax.random.normal(kb, (Cout,), dtype=jnp.float32) * 0.1

    w2, b2 = prepare_params(w, b)           # one-time, per-model
    fwd = jax.jit(out_branch_forward)
    out = jax.block_until_ready(fwd(x, w2, b2))

    # Sanity check against XLA's conv (same semantics as nn.Conv2d padding=1).
    ref = jax.lax.conv_general_dilated(
        x, w, window_strides=(1, 1), padding="SAME",
        dimension_numbers=("NCHW", "OIHW", "NCHW"),
    ) + b[None, :, None, None]
    assert out.shape == (N, Cout, H, W)
    assert jnp.allclose(out, ref, atol=1e-4, rtol=1e-4)

    print("KERNEL_OK")
</pallas_src>

<mosaic_0001>
module attributes {stable_mosaic.version = 11 : i64} {
  func.func @_conv3x3_mxu_kernel(%arg0: i32, %arg1: memref<8x36xf32, #tpu.memory_space<vmem>>, %arg2: memref<8x1xf32, #tpu.memory_space<vmem>>, %arg3: memref<36x768xf32, #tpu.memory_space<vmem>>, %arg4: memref<8x768xf32, #tpu.memory_space<vmem>>) attributes {dimension_semantics = [#tpu.dimension_semantics<arbitrary>], iteration_bounds = array<i64: 1>, scalar_prefetch = 0 : i64, scratch_operands = 0 : i64, tpu.core_type = #tpu.core_type<tc>, window_params = [{pipeline_mode = #tpu.pipeline_mode<synchronous>, transform_indices = @transform_0, window_bounds = array<i64: 8, 36>}, {pipeline_mode = #tpu.pipeline_mode<synchronous>, transform_indices = @transform_1, window_bounds = array<i64: 8, 1>}, {pipeline_mode = #tpu.pipeline_mode<synchronous>, transform_indices = @transform_2, window_bounds = array<i64: 36, 768>}, {pipeline_mode = #tpu.pipeline_mode<synchronous>, transform_indices = @transform_3, window_bounds = array<i64: 8, 768>}]} {
    %c0 = arith.constant 0 : index
    %c0_0 = arith.constant 0 : index
    %0 = vector.load %arg1[%c0, %c0_0] : memref<8x36xf32, #tpu.memory_space<vmem>>, vector<8x36xf32>
    %c0_1 = arith.constant 0 : index
    %c0_2 = arith.constant 0 : index
    %1 = vector.load %arg3[%c0_1, %c0_2] : memref<36x768xf32, #tpu.memory_space<vmem>>, vector<36x768xf32>
    %cst = arith.constant dense<0.000000e+00> : vector<8x768xf32>
    %2 = tpu.matmul %0, %1, %cst {dimension_numbers = #tpu.dot_dimension_numbers<[1], [0], [0], [1], [0, 0, 1, 1], [], []>} : vector<8x36xf32>, vector<36x768xf32>, vector<8x768xf32> -> vector<8x768xf32>
    %c0_3 = arith.constant 0 : index
    %c0_4 = arith.constant 0 : index
    %3 = vector.load %arg2[%c0_3, %c0_4] : memref<8x1xf32, #tpu.memory_space<vmem>>, vector<8x1xf32>
    %4 = vector.broadcast %3 : vector<8x1xf32> to vector<8x768xf32>
    %5 = arith.addf %2, %4 : vector<8x768xf32>
    %c0_5 = arith.constant 0 : index
    %c0_6 = arith.constant 0 : index
    %6 = vector.load %arg4[%c0_5, %c0_6] : memref<8x768xf32, #tpu.memory_space<vmem>>, vector<8x768xf32>
    tpu.vector_store %arg4[%c0_5, %c0_6], %5 {strides = array<i32>} : memref<8x768xf32, #tpu.memory_space<vmem>>, vector<8x768xf32>,
    return
  }
  func.func @transform_0(%arg0: i32) -> (i32, i32) {
    %c0_i32 = arith.constant 0 : i32
    %c0_i32_0 = arith.constant 0 : i32
    %c0_i32_1 = arith.constant 0 : i32
    return %c0_i32, %c0_i32_0 : i32, i32
  }
  func.func @transform_1(%arg0: i32) -> (i32, i32) {
    %c0_i32 = arith.constant 0 : i32
    %c0_i32_0 = arith.constant 0 : i32
    %c0_i32_1 = arith.constant 0 : i32
    return %c0_i32, %c0_i32_0 : i32, i32
  }
  func.func @transform_2(%arg0: i32) -> (i32, i32) {
    %c0_i32 = arith.constant 0 : i32
    %c0_i32_0 = arith.constant 0 : i32
    %c0_i32_1 = arith.constant 0 : i32
    return %c0_i32, %c0_i32_0 : i32, i32
  }
  func.func @transform_3(%arg0: i32) -> (i32, i32) {
    %c0_i32 = arith.constant 0 : i32
    %c0_i32_0 = arith.constant 0 : i32
    %c0_i32_1 = arith.constant 0 : i32
    return %c0_i32, %c0_i32_0 : i32, i32
  }
}

</mosaic_0001>

<llo_original>
// kernel: out_branch_forward.1
$region0: #{out_branch_forward.1}
  #allocation0 [shape = 'u32[]', space=smem, size = 0x4, offset = 0x4, fixed_abs, tag = 'smem constant byte address 0x4 - core index']
  #allocation1 [shape = 'u32[144,128]{1,0:T(1,128)}', space=vmem, size = 0x12000, scoped, tag = 'internal scratch']
  %s0 = inlined_call_operand.vmem [shape: f32[8,36], index: 0, kind: input, shape index: {}]
  %s1 = inlined_call_operand.vmem [shape: f32[8,1], index: 1, kind: input, shape index: {}]
  %s2 = inlined_call_operand.vmem [shape: f32[36,768], index: 2, kind: input, shape index: {}]
  %s3 = inlined_call_operand.vmem [shape: f32[8,768], index: 3, kind: output, shape index: {}]
  %s4 = sld [smem:[#allocation0]]
  $region22: #{out_branch_forward.1} parent=0
    _
  %s6 = ssub.s32 1, %s4
  %s7 = scalar_select 0, %s6, %s4
  // Predicated region
  $region2: #{out_branch_forward.1} parent=0 // pred_check
    _
  $region3: #{out_branch_forward.1} parent=0 // pred_check_branch
    %9 = sbr.rel (0) target = $region5
  $region4: #{out_branch_forward.1} parent=0 // pred_region
    _
  $region5: #{out_branch_forward.1} parent=0 // pred_fallthru
    _
  // Predicated region
  $region6: #{out_branch_forward.1} parent=0 // pred_check
    _
  $region7: #{out_branch_forward.1} parent=0 // pred_check_branch
    %11 = sbr.rel (0) target = $region9
  $region8: #{out_branch_forward.1} parent=0 // pred_region
    _
  $region9: #{out_branch_forward.1} parent=0 // pred_fallthru
    _
  // Predicated region
  $region10: #{out_branch_forward.1} parent=0 // pred_check
    _
  $region11: #{out_branch_forward.1} parent=0 // pred_check_branch
    %13 = sbr.rel (0) target = $region13
  $region12: #{out_branch_forward.1} parent=0 // pred_region
    _
  $region13: #{out_branch_forward.1} parent=0 // pred_fallthru
    _
  %v14 = vld [vmem:[%s0] sm:$0xff]
  %v15 = vld [vmem:[%s2] sm:$0xff]
  %v16 = vld [vmem:[%s2 + $0x8] sm:$0xff]
  %v17 = vld [vmem:[%s2 + $0x10] sm:$0xff]
  %v18 = vld [vmem:[%s2 + $0x18] sm:$0xff]
  %v19 = vld [vmem:[%s2 + $0x20] sm:$0xff]
  %v20 = vld [vmem:[%s2 + $0x28] sm:$0xff]
  %v21 = vld [vmem:[%s2 + $0x30] sm:$0xff]
  %v22 = vld [vmem:[%s2 + $0x38] sm:$0xff]
  %v23 = vld [vmem:[%s2 + $0x40] sm:$0xff]
  %v24 = vld [vmem:[%s2 + $0x48] sm:$0xff]
  %v25 = vld [vmem:[%s2 + $0x50] sm:$0xff]
  %v26 = vld [vmem:[%s2 + $0x58] sm:$0xff]
  %v27 = vld [vmem:[%s2 + $0x60] sm:$0xff]
  %v28 = vld [vmem:[%s2 + $0x68] sm:$0xff]
  %v29 = vld [vmem:[%s2 + $0x70] sm:$0xff]
  %v30 = vld [vmem:[%s2 + $0x78] sm:$0xff]
  %v31 = vld [vmem:[%s2 + $0x80] sm:$0xff]
  %v32 = vld [vmem:[%s2 + $0x88] sm:$0xff]
  %v33 = vld [vmem:[%s2 + $0x90] sm:$0xff]
  %v34 = vld [vmem:[%s2 + $0x98] sm:$0xff]
  %v35 = vld [vmem:[%s2 + $0xa0] sm:$0xff]
  %v36 = vld [vmem:[%s2 + $0xa8] sm:$0xff]
  %v37 = vld [vmem:[%s2 + $0xb0] sm:$0xff]
  %v38 = vld [vmem:[%s2 + $0xb8] sm:$0xff]
  %v39 = vld [vmem:[%s2 + $0xc0] sm:$0xf]
  %v40 = vld [vmem:[%s2 + $0xc8] sm:$0xf]
  %v41 = vld [vmem:[%s2 + $0xd0] sm:$0xf]
  %v42 = vld [vmem:[%s2 + $0xd8] sm:$0xf]
  %v43 = vld [vmem:[%s2 + $0xe0] sm:$0xf]
  %v44 = vld [vmem:[%s2 + $0xe8] sm:$0xf]
  %v45 = vld [vmem:[%s1] sm:$0xff]
  %47 = vset.pattern.permute.xlu0 0
  %48 = vperm.xlu0 %47, %v45
  %v49 = vpop.permute.xlu0 %48
  %vm51 = vcmask 293888
  %v53 = vsel %vm51, %v14, 0
  %vm55 = vcmask 1043456
  %v57 = vsel %vm55, %v39, 0
  %v60 = vsel %vm55, %v40, 0
  %v63 = vsel %vm55, %v41, 0
  %v66 = vsel %vm55, %v42, 0
  %v69 = vsel %vm55, %v43, 0
  %v72 = vsel %vm55, %v44, 0
  %74 = vmatprep.subr.mxu0 %v16
  %75 = vmatpush1.msra.mxu0 %v15
  %76 = vmatprep.subr.mxu0 %v22
  %77 = vmatpush1.msra.mxu0 %v21
  %78 = vmatprep.subr.mxu0 %v28
  %79 = vmatpush1.msra.mxu0 %v27
  %80 = vmatprep.subr.mxu0 %v34
  %81 = vmatpush1.msra.mxu0 %v33
  %82 = vmatprep.subr.mxu0 %v60
  %83 = vmatpush1.msra.mxu0 %v57
  %84 = vmatprep.subr.mxu0 0.0
  %85 = vmatpush1.msra.mxu0 0.0
  %86 = vmatprep.subr.mxu0 0.0
  %87 = vmatpush1.msra.mxu0 0.0
  %88 = vmatprep.subr.mxu0 0.0
  %89 = vmatpush1.msra.mxu0 0.0
  %90 = vmatprep.subr.mxu0 0.0
  %91 = vmatpush1.msra.mxu0 0.0
  %92 = vmatprep.subr.mxu0 0.0
  %93 = vmatpush1.msra.mxu0 0.0
  %94 = vmatprep.subr.mxu0 0.0
  %95 = vmatpush1.msra.mxu0 0.0
  %96 = vmatprep.subr.mxu0 0.0
  %97 = vmatpush1.msra.mxu0 0.0
  %98 = vmatprep.subr.mxu0 0.0
  %99 = vmatpush1.msra.mxu0 0.0
  %100 = vmatprep.subr.mxu0 0.0
  %101 = vmatpush1.msra.mxu0 0.0
  %102 = vmatprep.subr.mxu0 0.0
  %103 = vmatpush1.msra.mxu0 0.0
  %104 = vmatprep.subr.mxu0 0.0
  %105 = vmatpush1.msra.mxu0 0.0
  %106 = vmatprep.subr.mxu0 0.0
  %107 = vmatpush1.msra.mxu0 0.0
  %108 = vmatprep.subr.mxu0 0.0
  %109 = vmatpush1.msra.mxu0 0.0
  %110 = vmatprep.subr.mxu0 0.0
  %111 = vmatpush1.msra.mxu0 0.0
  %112 = vmatprep.subr.mxu0 0.0
  %113 = vmatpush1.msra.mxu0 0.0
  %114 = vmatprep.subr.mxu0 0.0
  %115 = vmatpush1.msra.mxu0 0.0
  %116 = vmatprep.subr.mxu0 0.0
  %117 = vmatpush1.msra.mxu0 0.0
  %118 = vmatprep.subr.mxu0 0.0
  %119 = vmatpush1.msra.mxu0 0.0
  %120 = vmatprep.subr.mxu0 0.0
  %121 = vmatpush1.msra.mxu0 0.0
  %122 = vmatprep.subr.mxu0 0.0
  %123 = vmatpush1.msra.mxu0 0.0
  %124 = vmatprep.subr.mxu0 0.0
  %125 = vmatpush1.msra.mxu0 0.0
  %126 = vmatprep.subr.mxu0 0.0
  %127 = vmatpush1.msra.mxu0 0.0
  %128 = vmatprep.subr.mxu0 0.0
  %129 = vmatpush1.msra.mxu0 0.0
  %130 = vmatprep.subr.mxu0 0.0
  %131 = vmatpush1.msra.mxu0 0.0
  %132 = vmatprep.subr.mxu0 0.0
  %133 = vmatpush1.msra.mxu0 0.0
  %134 = vmatprep.subr.mxu0 0.0
  %135 = vmatpush1.msra.mxu0 0.0
  %136 = vmatprep.subr.mxu0 0.0
  %137 = vmatpush1.msra.mxu0 0.0
  %138 = vmatprep.mubr.f32.mxu0 0.0
  %139 = vmatmul.mubr.f32.gmra.mrb[0].mxu0 %v53
  %v140 = vpop.f32.mrb[0].mxu0
  %v141 = vadd.f32 %v49, %v140
  %v142 = vpop.f32.mrb[0].mxu0
  %v143 = vadd.f32 %v49, %v142
  %144 = vdwg.mxu0
  %145 = vmatprep.subr.mxu0 %v18
  %146 = vmatpush1.msra.mxu0 %v17
  %147 = vmatprep.subr.mxu0 %v24
  %148 = vmatpush1.msra.mxu0 %v23
  %149 = vmatprep.subr.mxu0 %v30
  %150 = vmatpush1.msra.mxu0 %v29
  %151 = vmatprep.subr.mxu0 %v36
  %152 = vmatpush1.msra.mxu0 %v35
  %153 = vmatprep.subr.mxu0 %v66
  %154 = vmatpush1.msra.mxu0 %v63
  %155 = vmatprep.subr.mxu0 0.0
  %156 = vmatpush1.msra.mxu0 0.0
  %157 = vmatprep.subr.mxu0 0.0
  %158 = vmatpush1.msra.mxu0 0.0
  %159 = vmatprep.subr.mxu0 0.0
  %160 = vmatpush1.msra.mxu0 0.0
  %161 = vmatprep.subr.mxu0 0.0
  %162 = vmatpush1.msra.mxu0 0.0
  %163 = vmatprep.subr.mxu0 0.0
  %164 = vmatpush1.msra.mxu0 0.0
  %165 = vmatprep.subr.mxu0 0.0
  %166 = vmatpush1.msra.mxu0 0.0
  %167 = vmatprep.subr.mxu0 0.0
  %168 = vmatpush1.msra.mxu0 0.0
  %169 = vmatprep.subr.mxu0 0.0
  %170 = vmatpush1.msra.mxu0 0.0
  %171 = vmatprep.subr.mxu0 0.0
  %172 = vmatpush1.msra.mxu0 0.0
  %173 = vmatprep.subr.mxu0 0.0
  %174 = vmatpush1.msra.mxu0 0.0
  %175 = vmatprep.subr.mxu0 0.0
  %176 = vmatpush1.msra.mxu0 0.0
  %177 = vmatprep.subr.mxu0 0.0
  %178 = vmatpush1.msra.mxu0 0.0
  %179 = vmatprep.subr.mxu0 0.0
  %180 = vmatpush1.msra.mxu0 0.0
  %181 = vmatprep.subr.mxu0 0.0
  %182 = vmatpush1.msra.mxu0 0.0
  %183 = vmatprep.subr.mxu0 0.0
  %184 = vmatpush1.msra.mxu0 0.0
  %185 = vmatprep.subr.mxu0 0.0
  %186 = vmatpush1.msra.mxu0 0.0
  %187 = vmatprep.subr.mxu0 0.0
  %188 = vmatpush1.msra.mxu0 0.0
  %189 = vmatprep.subr.mxu0 0.0
  %190 = vmatpush1.msra.mxu0 0.0
  %191 = vmatprep.subr.mxu0 0.0
  %192 = vmatpush1.msra.mxu0 0.0
  %193 = vmatprep.subr.mxu0 0.0
  %194 = vmatpush1.msra.mxu0 0.0
  %195 = vmatprep.subr.mxu0 0.0
  %196 = vmatpush1.msra.mxu0 0.0
  %197 = vmatprep.subr.mxu0 0.0
  %198 = vmatpush1.msra.mxu0 0.0
  %199 = vmatprep.subr.mxu0 0.0
  %200 = vmatpush1.msra.mxu0 0.0
  %201 = vmatprep.subr.mxu0 0.0
  %202 = vmatpush1.msra.mxu0 0.0
  %203 = vmatprep.subr.mxu0 0.0
  %204 = vmatpush1.msra.mxu0 0.0
  %205 = vmatprep.subr.mxu0 0.0
  %206 = vmatpush1.msra.mxu0 0.0
  %207 = vmatprep.subr.mxu0 0.0
  %208 = vmatpush1.msra.mxu0 0.0
  %209 = vmatprep.mubr.f32.mxu0 0.0
  %210 = vmatmul.mubr.f32.gmra.mrb[0].mxu0 %v53
  %v211 = vpop.f32.mrb[0].mxu0
  %v212 = vadd.f32 %v49, %v211
  %v213 = vpop.f32.mrb[0].mxu0
  %v214 = vadd.f32 %v49, %v213
  %215 = vdwg.mxu0
  %216 = vmatprep.subr.mxu0 %v20
  %217 = vmatpush1.msra.mxu0 %v19
  %218 = vmatprep.subr.mxu0 %v26
  %219 = vmatpush1.msra.mxu0 %v25
  %220 = vmatprep.subr.mxu0 %v32
  %221 = vmatpush1.msra.mxu0 %v31
  %222 = vmatprep.subr.mxu0 %v38
  %223 = vmatpush1.msra.mxu0 %v37
  %224 = vmatprep.subr.mxu0 %v72
  %225 = vmatpush1.msra.mxu0 %v69
  %226 = vmatprep.subr.mxu0 0.0
  %227 = vmatpush1.msra.mxu0 0.0
  %228 = vmatprep.subr.mxu0 0.0
  %229 = vmatpush1.msra.mxu0 0.0
  %230 = vmatprep.subr.mxu0 0.0
  %231 = vmatpush1.msra.mxu0 0.0
  %232 = vmatprep.subr.mxu0 0.0
  %233 = vmatpush1.msra.mxu0 0.0
  %234 = vmatprep.subr.mxu0 0.0
  %235 = vmatpush1.msra.mxu0 0.0
  %236 = vmatprep.subr.mxu0 0.0
  %237 = vmatpush1.msra.mxu0 0.0
  %238 = vmatprep.subr.mxu0 0.0
  %239 = vmatpush1.msra.mxu0 0.0
  %240 = vmatprep.subr.mxu0 0.0
  %241 = vmatpush1.msra.mxu0 0.0
  %242 = vmatprep.subr.mxu0 0.0
  %243 = vmatpush1.msra.mxu0 0.0
  %244 = vmatprep.subr.mxu0 0.0
  %245 = vmatpush1.msra.mxu0 0.0
  %246 = vmatprep.subr.mxu0 0.0
  %247 = vmatpush1.msra.mxu0 0.0
  %248 = vmatprep.subr.mxu0 0.0
  %249 = vmatpush1.msra.mxu0 0.0
  %250 = vmatprep.subr.mxu0 0.0
  %251 = vmatpush1.msra.mxu0 0.0
  %252 = vmatprep.subr.mxu0 0.0
  %253 = vmatpush1.msra.mxu0 0.0
  %254 = vmatprep.subr.mxu0 0.0
  %255 = vmatpush1.msra.mxu0 0.0
  %256 = vmatprep.subr.mxu0 0.0
  %257 = vmatpush1.msra.mxu0 0.0
  %258 = vmatprep.subr.mxu0 0.0
  %259 = vmatpush1.msra.mxu0 0.0
  %260 = vmatprep.subr.mxu0 0.0
  %261 = vmatpush1.msra.mxu0 0.0
  %262 = vmatprep.subr.mxu0 0.0
  %263 = vmatpush1.msra.mxu0 0.0
  %264 = vmatprep.subr.mxu0 0.0
  %265 = vmatpush1.msra.mxu0 0.0
  %266 = vmatprep.subr.mxu0 0.0
  %267 = vmatpush1.msra.mxu0 0.0
  %268 = vmatprep.subr.mxu0 0.0
  %269 = vmatpush1.msra.mxu0 0.0
  %270 = vmatprep.subr.mxu0 0.0
  %271 = vmatpush1.msra.mxu0 0.0
  %272 = vmatprep.subr.mxu0 0.0
  %273 = vmatpush1.msra.mxu0 0.0
  %274 = vmatprep.subr.mxu0 0.0
  %275 = vmatpush1.msra.mxu0 0.0
  %276 = vmatprep.subr.mxu0 0.0
  %277 = vmatpush1.msra.mxu0 0.0
  %278 = vmatprep.subr.mxu0 0.0
  %279 = vmatpush1.msra.mxu0 0.0
  %280 = vmatprep.mubr.f32.mxu0 0.0
  %281 = vmatmul.mubr.f32.gmra.mrb[0].mxu0 %v53
  %v282 = vpop.f32.mrb[0].mxu0
  %v283 = vadd.f32 %v49, %v282
  %v284 = vpop.f32.mrb[0].mxu0
  %v285 = vadd.f32 %v49, %v284
  %286 = vdwg.mxu0
  %287 = vst [vmem:[%s3] sm:$0xff] %v141
  %288 = vst [vmem:[%s3 + $0x8] sm:$0xff] %v143
  %289 = vst [vmem:[%s3 + $0x10] sm:$0xff] %v212
  %290 = vst [vmem:[%s3 + $0x18] sm:$0xff] %v214
  %291 = vst [vmem:[%s3 + $0x20] sm:$0xff] %v283
  %292 = vst [vmem:[%s3 + $0x28] sm:$0xff] %v285
  // Predicated region
  $region14: #{out_branch_forward.1} parent=0 // pred_check
    _
  $region15: #{out_branch_forward.1} parent=0 // pred_check_branch
    %294 = sbr.rel (0) target = $region17
  $region16: #{out_branch_forward.1} parent=0 // pred_region
    _
  $region17: #{out_branch_forward.1} parent=0 // pred_fallthru
    _
  // Predicated region
  $region18: #{out_branch_forward.1} parent=0 // pred_check
    _
  $region19: #{out_branch_forward.1} parent=0 // pred_check_branch
    %296 = sbr.rel (0) target = $region21
  $region20: #{out_branch_forward.1} parent=0 // pred_region
    _
  $region21: #{out_branch_forward.1} parent=0 // pred_fallthru
    _

</llo_original>
